<compile_context>
chip_gen: v5e
topology: v5e:2x2
jax: 0.10.0
libtpu: 0.0.40
codegen_flags: <defaults>
</compile_context>

<pallas_src>
import jax
import jax.numpy as jnp
from jax.experimental import pallas as pl
from jax.experimental.pallas import tpu as pltpu


def lstm_forward_kernel(xf_ref, w_ref, b_ref, wfc_ref, bfc_ref, out_ref,
                        xproj_ref):
    # xf_ref:    (T*B, D_in)   time-major flattened input sequence
    # w_ref:     (D_in+H, G4)  stacked [[W_ih^T]; [W_hh^T]], gate cols packed i|f|g|o
    # b_ref:     (1, G4)       b_ih + b_hh (f32)
    # wfc_ref:   (H, Dp)       fc weight^T, lane-padded
    # bfc_ref:   (1, Dp)       fc bias, lane-padded (f32)
    # out_ref:   (S, B, Dp)    step-major, lane-dense output
    # xproj_ref: (T*B, G4) f32 scratch: x @ W_ih^T + b for the whole sequence
    TB, D_in = xf_ref.shape
    S, B, Dp = out_ref.shape
    T = TB // B
    KH, G4 = w_ref.shape
    H = KH - D_in

    # ---- hoisted loop invariants -------------------------------------------
    b_row = b_ref[...]                                    # (1, G4) f32
    b_full = jnp.broadcast_to(b_row, (B, G4))             # phase-3 gate bias
    bfc_full = jnp.broadcast_to(bfc_ref[...], (B, Dp))    # fc bias
    wih_w = w_ref[pl.ds(0, D_in), :]                      # (D_in, G4) row view
    whh_w = w_ref[pl.ds(D_in, H), :]                      # (H, G4) aligned row view
    wfc_w = wfc_ref[...]                                  # (H, Dp)
    lane = jax.lax.broadcasted_iota(jnp.int32, (B, G4), 1)
    g_mask = (lane >= 2 * H) & (lane < 3 * H)             # tanh (cell-input) lanes

    def mdot(a, w):  # MXU matmul, f32 accumulation (weights may be bf16)
        return jnp.dot(a.astype(w.dtype), w, preferred_element_type=jnp.float32)

    # ---- phase 1: whole-sequence input projection (one big MXU matmul) ------
    xproj_ref[...] = mdot(xf_ref[...], wih_w) + jnp.broadcast_to(b_row, (TB, G4))

    h = jnp.zeros((B, H), jnp.float32)
    c = jnp.zeros((B, H), jnp.float32)

    def apply_gates(gates, c):
        # single packed activation pass over the (B, G4) gate vreg
        act = jnp.where(g_mask, jnp.tanh(gates), jax.nn.sigmoid(gates))
        i = act[:, 0:H]
        f = act[:, H:2 * H]
        g = act[:, 2 * H:3 * H]
        o = act[:, 3 * H:4 * H]
        c_new = f * c + i * g
        h_new = o * jnp.tanh(c_new)
        return h_new, c_new

    def fc_relu(h):
        return jnp.maximum(mdot(h, wfc_w) + bfc_full, 0.0)

    # ---- phase 2: recurrence over the input sequence (small static T) -------
    for t in range(T):
        gates = xproj_ref[pl.ds(t * B, B), :] + mdot(h, whh_w)
        h, c = apply_gates(gates, c)

    y = fc_relu(h)
    out_ref[0] = y

    # ---- phase 3: autoregressive feedback, state carried in registers -------
    for s in range(1, S):
        gates = mdot(y[:, 0:D_in], wih_w) + mdot(h, whh_w) + b_full
        h, c = apply_gates(gates, c)
        y = fc_relu(h)
        out_ref[s] = y


def lstm_model_forward(x, params, steps_to_predict, weights_dtype=jnp.float32):
    """x: (B, T, D_in) batch-first (PyTorch convention). Returns (B, S, D_out)."""
    W_ih, W_hh, b_ih, b_hh, W_fc, b_fc = params
    B, T, D_in = x.shape
    H = W_hh.shape[1]
    D_out = W_fc.shape[0]
    S = int(steps_to_predict)
    assert D_out == D_in, "feedback requires output_size == input_size"

    LANE, SUB = 128, 8
    G4 = ((4 * H + LANE - 1) // LANE) * LANE     # packed gate lanes (128 for H=32)
    Dp = ((D_out + LANE - 1) // LANE) * LANE     # fc-output lane padding
    Bp = ((B + SUB - 1) // SUB) * SUB            # batch sublane padding
    f32 = jnp.float32
    wdt = weights_dtype

    # Stacked [[W_ih^T]; [W_hh^T]], gate columns packed (i|f|g|o), lane-padded
    # to G4. Holds both the input and recurrent weights; the kernel uses
    # aligned row views, so there is no duplicated W_hh buffer.
    wcomb = jnp.concatenate([W_ih.T.astype(f32), W_hh.T.astype(f32)], axis=0)
    wcomb = jnp.pad(wcomb, ((0, 0), (0, G4 - 4 * H))).astype(wdt)     # (D_in+H, G4)
    b = jnp.pad((b_ih + b_hh).astype(f32), (0, G4 - 4 * H)).reshape(1, G4)
    wfc = jnp.pad(W_fc.T.astype(f32),
                  ((0, 0), (0, Dp - D_out))).astype(wdt)              # (H, Dp)
    bfc = jnp.pad(b_fc.astype(f32), (0, Dp - D_out)).reshape(1, Dp)

    x_p = jnp.pad(x.astype(f32), ((0, Bp - B), (0, 0), (0, 0)))       # (Bp, T, D_in)
    x_tm = jnp.transpose(x_p, (1, 0, 2)).reshape(T * Bp, D_in).astype(wdt)

    flops = (2 * T * Bp * D_in * G4                 # phase-1 projection
             + T * 2 * Bp * H * G4                  # phase-2 recurrent dots
             + (S - 1) * 2 * Bp * (D_in + H) * G4   # phase-3 feedback dots
             + S * 2 * Bp * H * Dp)                 # fc
    transcendentals = (T + S - 1) * Bp * (2 * G4 + H)
    wbytes = jnp.dtype(wdt).itemsize
    bytes_accessed = (wbytes * (x_tm.size + wcomb.size + wfc.size)
                      + 4 * (b.size + bfc.size + S * Bp * Dp))

    out_sm = pl.pallas_call(
        lstm_forward_kernel,
        out_shape=jax.ShapeDtypeStruct((S, Bp, Dp), f32),
        in_specs=[pl.BlockSpec(memory_space=pltpu.MemorySpace.VMEM)] * 5,
        out_specs=pl.BlockSpec(memory_space=pltpu.MemorySpace.VMEM),
        scratch_shapes=[pltpu.VMEM((T * Bp, G4), jnp.float32)],
        compiler_params=pltpu.CompilerParams(
            # real footprint is ~100 KiB at these shapes; keep the scoped-VMEM
            # reservation small so surrounding XLA fusions keep their headroom.
            vmem_limit_bytes=4 * 1024 * 1024),
        cost_estimate=pl.CostEstimate(
            flops=flops, transcendentals=transcendentals,
            bytes_accessed=bytes_accessed),
    )(x_tm, wcomb, b, wfc, bfc)

    # strip padding, return batch-first like PyTorch
    return jnp.transpose(out_sm[:, :B, :D_out], (1, 0, 2))            # (B, S, D_out)


def reference_forward(x, params, steps_to_predict):
    """Pure-JAX mirror of the PyTorch forward (for correctness checking)."""
    W_ih, W_hh, b_ih, b_hh, W_fc, b_fc = params
    B = x.shape[0]
    H = W_hh.shape[1]
    h = jnp.zeros((B, H), jnp.float32)
    c = jnp.zeros((B, H), jnp.float32)

    def cell(xt, h, c):
        g = xt @ W_ih.T + b_ih + h @ W_hh.T + b_hh
        i = jax.nn.sigmoid(g[:, :H])
        f = jax.nn.sigmoid(g[:, H:2 * H])
        gg = jnp.tanh(g[:, 2 * H:3 * H])
        o = jax.nn.sigmoid(g[:, 3 * H:])
        c = f * c + i * gg
        h = o * jnp.tanh(c)
        return h, c

    outs = []
    for s in range(steps_to_predict):
        if s == 0:
            for t in range(x.shape[1]):
                h, c = cell(x[:, t, :], h, c)
        else:
            h, c = cell(outs[-1], h, c)
        outs.append(jnp.maximum(h @ W_fc.T + b_fc, 0.0))
    return jnp.stack(outs, axis=1)


if __name__ == "__main__":
    # Small shapes consistent with the module: output_size == input_size because
    # the fc output is fed back into the LSTM.
    B, T, D_in, H, D_out, STEPS = 2, 8, 8, 32, 8, 4

    key = jax.random.PRNGKey(0)
    ks = jax.random.split(key, 7)
    bound = 1.0 / float(jnp.sqrt(H))
    W_ih = jax.random.uniform(ks[0], (4 * H, D_in), jnp.float32, -bound, bound)
    W_hh = jax.random.uniform(ks[1], (4 * H, H), jnp.float32, -bound, bound)
    b_ih = jax.random.uniform(ks[2], (4 * H,), jnp.float32, -bound, bound)
    b_hh = jax.random.uniform(ks[3], (4 * H,), jnp.float32, -bound, bound)
    W_fc = jax.random.uniform(ks[4], (D_out, H), jnp.float32, -bound, bound)
    b_fc = jax.random.uniform(ks[5], (D_out,), jnp.float32, -bound, bound)
    params = (W_ih, W_hh, b_ih, b_hh, W_fc, b_fc)

    x = jax.random.normal(ks[6], (B, T, D_in), jnp.float32)

    # f32 weights by default so the tight reference check holds; pass
    # weights_dtype=jnp.bfloat16 on v6e/v7x for the native-rate MXU path.
    out = jax.block_until_ready(lstm_model_forward(x, params, STEPS))
    ref = jax.block_until_ready(reference_forward(x, params, STEPS))

    assert out.shape == (B, STEPS, D_out)
    max_err = float(jnp.max(jnp.abs(out - ref)))
    assert jnp.allclose(out, ref, atol=1e-4, rtol=1e-4), f"max abs err {max_err}"

    print("KERNEL_OK")
</pallas_src>

<mosaic_0001>
module attributes {stable_mosaic.version = 11 : i64} {
  func.func @lstm_forward_kernel(%arg0: memref<64x8xf32, #tpu.memory_space<vmem>>, %arg1: memref<40x128xf32, #tpu.memory_space<vmem>>, %arg2: memref<1x128xf32, #tpu.memory_space<vmem>>, %arg3: memref<32x128xf32, #tpu.memory_space<vmem>>, %arg4: memref<1x128xf32, #tpu.memory_space<vmem>>, %arg5: memref<4x8x128xf32, #tpu.memory_space<vmem>>, %arg6: memref<64x128xf32, #tpu.memory_space<vmem>>) attributes {dimension_semantics = [], scalar_prefetch = 0 : i64, scratch_operands = 1 : i64, tpu.core_type = #tpu.core_type<tc>} {
    %c0 = arith.constant 0 : index
    %c0_0 = arith.constant 0 : index
    %0 = vector.load %arg2[%c0, %c0_0] : memref<1x128xf32, #tpu.memory_space<vmem>>, vector<1x128xf32>
    %1 = vector.shape_cast %0 : vector<1x128xf32> to vector<1x128xf32>
    %2 = vector.broadcast %1 : vector<1x128xf32> to vector<8x128xf32>
    %c0_1 = arith.constant 0 : index
    %c0_2 = arith.constant 0 : index
    %3 = vector.load %arg4[%c0_1, %c0_2] : memref<1x128xf32, #tpu.memory_space<vmem>>, vector<1x128xf32>
    %4 = vector.shape_cast %3 : vector<1x128xf32> to vector<1x128xf32>
    %5 = vector.broadcast %4 : vector<1x128xf32> to vector<8x128xf32>
    %c0_3 = arith.constant 0 : index
    %c0_4 = arith.constant 0 : index
    %6 = vector.load %arg1[%c0_3, %c0_4] : memref<40x128xf32, #tpu.memory_space<vmem>>, vector<8x128xf32>
    %c8 = arith.constant 8 : index
    %c0_5 = arith.constant 0 : index
    %7 = vector.load %arg1[%c8, %c0_5] : memref<40x128xf32, #tpu.memory_space<vmem>>, vector<32x128xf32>
    %c0_6 = arith.constant 0 : index
    %c0_7 = arith.constant 0 : index
    %8 = vector.load %arg3[%c0_6, %c0_7] : memref<32x128xf32, #tpu.memory_space<vmem>>, vector<32x128xf32>
    %9 = tpu.iota {dimensions = array<i32: 1>} : vector<8x128xi32>
    %c64_i32 = arith.constant 64 : i32
    %10 = vector.broadcast %c64_i32 : i32 to vector<8x128xi32>
    %11 = arith.cmpi sge, %9, %10 : vector<8x128xi32>
    %c96_i32 = arith.constant 96 : i32
    %12 = vector.broadcast %c96_i32 : i32 to vector<8x128xi32>
    %13 = arith.cmpi slt, %9, %12 : vector<8x128xi32>
    %14 = arith.andi %11, %13 : vector<8x128xi1>
    %c0_8 = arith.constant 0 : index
    %c0_9 = arith.constant 0 : index
    %15 = vector.load %arg0[%c0_8, %c0_9] : memref<64x8xf32, #tpu.memory_space<vmem>>, vector<64x8xf32>
    %cst = arith.constant dense<0.000000e+00> : vector<64x128xf32>
    %16 = tpu.matmul %15, %6, %cst {dimension_numbers = #tpu.dot_dimension_numbers<[1], [0], [0], [1], [0, 0, 1, 1], [], []>} : vector<64x8xf32>, vector<8x128xf32>, vector<64x128xf32> -> vector<64x128xf32>
    %17 = vector.shape_cast %0 : vector<1x128xf32> to vector<1x128xf32>
    %18 = vector.broadcast %17 : vector<1x128xf32> to vector<64x128xf32>
    %19 = arith.addf %16, %18 : vector<64x128xf32>
    %c0_10 = arith.constant 0 : index
    %c0_11 = arith.constant 0 : index
    %20 = vector.load %arg6[%c0_10, %c0_11] : memref<64x128xf32, #tpu.memory_space<vmem>>, vector<64x128xf32>
    tpu.vector_store %arg6[%c0_10, %c0_11], %19 {strides = array<i32>} : memref<64x128xf32, #tpu.memory_space<vmem>>, vector<64x128xf32>,
    %cst_12 = arith.constant 0.000000e+00 : f32
    %21 = vector.broadcast %cst_12 : f32 to vector<8x32xf32>
    %cst_13 = arith.constant 0.000000e+00 : f32
    %22 = vector.broadcast %cst_13 : f32 to vector<8x32xf32>
    %c0_14 = arith.constant 0 : index
    %c0_15 = arith.constant 0 : index
    %23 = vector.load %arg6[%c0_14, %c0_15] : memref<64x128xf32, #tpu.memory_space<vmem>>, vector<8x128xf32>
    %cst_16 = arith.constant dense<0.000000e+00> : vector<8x128xf32>
    %24 = tpu.matmul %21, %7, %cst_16 {dimension_numbers = #tpu.dot_dimension_numbers<[1], [0], [0], [1], [0, 0, 1, 1], [], []>} : vector<8x32xf32>, vector<32x128xf32>, vector<8x128xf32> -> vector<8x128xf32>
    %25 = arith.addf %23, %24 : vector<8x128xf32>
    %26 = math.tanh %25 : vector<8x128xf32>
    %27 = arith.negf %25 : vector<8x128xf32>
    %28 = math.exp %27 : vector<8x128xf32>
    %cst_17 = arith.constant 1.000000e+00 : f32
    %29 = vector.broadcast %cst_17 : f32 to vector<8x128xf32>
    %30 = arith.addf %29, %28 : vector<8x128xf32>
    %31 = arith.divf %29, %30 : vector<8x128xf32>
    %32 = arith.select %14, %26, %31 : vector<8x128xi1>, vector<8x128xf32>
    %33 = vector.extract_strided_slice %32 {offsets = [0, 0], sizes = [8, 32], strides = [1, 1]} : vector<8x128xf32> to vector<8x32xf32>
    %34 = vector.extract_strided_slice %32 {offsets = [0, 32], sizes = [8, 32], strides = [1, 1]} : vector<8x128xf32> to vector<8x32xf32>
    %35 = vector.extract_strided_slice %32 {offsets = [0, 64], sizes = [8, 32], strides = [1, 1]} : vector<8x128xf32> to vector<8x32xf32>
    %36 = vector.extract_strided_slice %32 {offsets = [0, 96], sizes = [8, 32], strides = [1, 1]} : vector<8x128xf32> to vector<8x32xf32>
    %37 = arith.mulf %34, %22 : vector<8x32xf32>
    %38 = arith.mulf %33, %35 : vector<8x32xf32>
    %39 = arith.addf %37, %38 : vector<8x32xf32>
    %40 = math.tanh %39 : vector<8x32xf32>
    %41 = arith.mulf %36, %40 : vector<8x32xf32>
    %c8_18 = arith.constant 8 : index
    %c0_19 = arith.constant 0 : index
    %42 = vector.load %arg6[%c8_18, %c0_19] : memref<64x128xf32, #tpu.memory_space<vmem>>, vector<8x128xf32>
    %cst_20 = arith.constant dense<0.000000e+00> : vector<8x128xf32>
    %43 = tpu.matmul %41, %7, %cst_20 {dimension_numbers = #tpu.dot_dimension_numbers<[1], [0], [0], [1], [0, 0, 1, 1], [], []>} : vector<8x32xf32>, vector<32x128xf32>, vector<8x128xf32> -> vector<8x128xf32>
    %44 = arith.addf %42, %43 : vector<8x128xf32>
    %45 = math.tanh %44 : vector<8x128xf32>
    %46 = arith.negf %44 : vector<8x128xf32>
    %47 = math.exp %46 : vector<8x128xf32>
    %cst_21 = arith.constant 1.000000e+00 : f32
    %48 = vector.broadcast %cst_21 : f32 to vector<8x128xf32>
    %49 = arith.addf %48, %47 : vector<8x128xf32>
    %50 = arith.divf %48, %49 : vector<8x128xf32>
    %51 = arith.select %14, %45, %50 : vector<8x128xi1>, vector<8x128xf32>
    %52 = vector.extract_strided_slice %51 {offsets = [0, 0], sizes = [8, 32], strides = [1, 1]} : vector<8x128xf32> to vector<8x32xf32>
    %53 = vector.extract_strided_slice %51 {offsets = [0, 32], sizes = [8, 32], strides = [1, 1]} : vector<8x128xf32> to vector<8x32xf32>
    %54 = vector.extract_strided_slice %51 {offsets = [0, 64], sizes = [8, 32], strides = [1, 1]} : vector<8x128xf32> to vector<8x32xf32>
    %55 = vector.extract_strided_slice %51 {offsets = [0, 96], sizes = [8, 32], strides = [1, 1]} : vector<8x128xf32> to vector<8x32xf32>
    %56 = arith.mulf %53, %39 : vector<8x32xf32>
    %57 = arith.mulf %52, %54 : vector<8x32xf32>
    %58 = arith.addf %56, %57 : vector<8x32xf32>
    %59 = math.tanh %58 : vector<8x32xf32>
    %60 = arith.mulf %55, %59 : vector<8x32xf32>
    %c16 = arith.constant 16 : index
    %c0_22 = arith.constant 0 : index
    %61 = vector.load %arg6[%c16, %c0_22] : memref<64x128xf32, #tpu.memory_space<vmem>>, vector<8x128xf32>
    %cst_23 = arith.constant dense<0.000000e+00> : vector<8x128xf32>
    %62 = tpu.matmul %60, %7, %cst_23 {dimension_numbers = #tpu.dot_dimension_numbers<[1], [0], [0], [1], [0, 0, 1, 1], [], []>} : vector<8x32xf32>, vector<32x128xf32>, vector<8x128xf32> -> vector<8x128xf32>
    %63 = arith.addf %61, %62 : vector<8x128xf32>
    %64 = math.tanh %63 : vector<8x128xf32>
    %65 = arith.negf %63 : vector<8x128xf32>
    %66 = math.exp %65 : vector<8x128xf32>
    %cst_24 = arith.constant 1.000000e+00 : f32
    %67 = vector.broadcast %cst_24 : f32 to vector<8x128xf32>
    %68 = arith.addf %67, %66 : vector<8x128xf32>
    %69 = arith.divf %67, %68 : vector<8x128xf32>
    %70 = arith.select %14, %64, %69 : vector<8x128xi1>, vector<8x128xf32>
    %71 = vector.extract_strided_slice %70 {offsets = [0, 0], sizes = [8, 32], strides = [1, 1]} : vector<8x128xf32> to vector<8x32xf32>
    %72 = vector.extract_strided_slice %70 {offsets = [0, 32], sizes = [8, 32], strides = [1, 1]} : vector<8x128xf32> to vector<8x32xf32>
    %73 = vector.extract_strided_slice %70 {offsets = [0, 64], sizes = [8, 32], strides = [1, 1]} : vector<8x128xf32> to vector<8x32xf32>
    %74 = vector.extract_strided_slice %70 {offsets = [0, 96], sizes = [8, 32], strides = [1, 1]} : vector<8x128xf32> to vector<8x32xf32>
    %75 = arith.mulf %72, %58 : vector<8x32xf32>
    %76 = arith.mulf %71, %73 : vector<8x32xf32>
    %77 = arith.addf %75, %76 : vector<8x32xf32>
    %78 = math.tanh %77 : vector<8x32xf32>
    %79 = arith.mulf %74, %78 : vector<8x32xf32>
    %c24 = arith.constant 24 : index
    %c0_25 = arith.constant 0 : index
    %80 = vector.load %arg6[%c24, %c0_25] : memref<64x128xf32, #tpu.memory_space<vmem>>, vector<8x128xf32>
    %cst_26 = arith.constant dense<0.000000e+00> : vector<8x128xf32>
    %81 = tpu.matmul %79, %7, %cst_26 {dimension_numbers = #tpu.dot_dimension_numbers<[1], [0], [0], [1], [0, 0, 1, 1], [], []>} : vector<8x32xf32>, vector<32x128xf32>, vector<8x128xf32> -> vector<8x128xf32>
    %82 = arith.addf %80, %81 : vector<8x128xf32>
    %83 = math.tanh %82 : vector<8x128xf32>
    %84 = arith.negf %82 : vector<8x128xf32>
    %85 = math.exp %84 : vector<8x128xf32>
    %cst_27 = arith.constant 1.000000e+00 : f32
    %86 = vector.broadcast %cst_27 : f32 to vector<8x128xf32>
    %87 = arith.addf %86, %85 : vector<8x128xf32>
    %88 = arith.divf %86, %87 : vector<8x128xf32>
    %89 = arith.select %14, %83, %88 : vector<8x128xi1>, vector<8x128xf32>
    %90 = vector.extract_strided_slice %89 {offsets = [0, 0], sizes = [8, 32], strides = [1, 1]} : vector<8x128xf32> to vector<8x32xf32>
    %91 = vector.extract_strided_slice %89 {offsets = [0, 32], sizes = [8, 32], strides = [1, 1]} : vector<8x128xf32> to vector<8x32xf32>
    %92 = vector.extract_strided_slice %89 {offsets = [0, 64], sizes = [8, 32], strides = [1, 1]} : vector<8x128xf32> to vector<8x32xf32>
    %93 = vector.extract_strided_slice %89 {offsets = [0, 96], sizes = [8, 32], strides = [1, 1]} : vector<8x128xf32> to vector<8x32xf32>
    %94 = arith.mulf %91, %77 : vector<8x32xf32>
    %95 = arith.mulf %90, %92 : vector<8x32xf32>
    %96 = arith.addf %94, %95 : vector<8x32xf32>
    %97 = math.tanh %96 : vector<8x32xf32>
    %98 = arith.mulf %93, %97 : vector<8x32xf32>
    %c32 = arith.constant 32 : index
    %c0_28 = arith.constant 0 : index
    %99 = vector.load %arg6[%c32, %c0_28] : memref<64x128xf32, #tpu.memory_space<vmem>>, vector<8x128xf32>
    %cst_29 = arith.constant dense<0.000000e+00> : vector<8x128xf32>
    %100 = tpu.matmul %98, %7, %cst_29 {dimension_numbers = #tpu.dot_dimension_numbers<[1], [0], [0], [1], [0, 0, 1, 1], [], []>} : vector<8x32xf32>, vector<32x128xf32>, vector<8x128xf32> -> vector<8x128xf32>
    %101 = arith.addf %99, %100 : vector<8x128xf32>
    %102 = math.tanh %101 : vector<8x128xf32>
    %103 = arith.negf %101 : vector<8x128xf32>
    %104 = math.exp %103 : vector<8x128xf32>
    %cst_30 = arith.constant 1.000000e+00 : f32
    %105 = vector.broadcast %cst_30 : f32 to vector<8x128xf32>
    %106 = arith.addf %105, %104 : vector<8x128xf32>
    %107 = arith.divf %105, %106 : vector<8x128xf32>
    %108 = arith.select %14, %102, %107 : vector<8x128xi1>, vector<8x128xf32>
    %109 = vector.extract_strided_slice %108 {offsets = [0, 0], sizes = [8, 32], strides = [1, 1]} : vector<8x128xf32> to vector<8x32xf32>
    %110 = vector.extract_strided_slice %108 {offsets = [0, 32], sizes = [8, 32], strides = [1, 1]} : vector<8x128xf32> to vector<8x32xf32>
    %111 = vector.extract_strided_slice %108 {offsets = [0, 64], sizes = [8, 32], strides = [1, 1]} : vector<8x128xf32> to vector<8x32xf32>
    %112 = vector.extract_strided_slice %108 {offsets = [0, 96], sizes = [8, 32], strides = [1, 1]} : vector<8x128xf32> to vector<8x32xf32>
    %113 = arith.mulf %110, %96 : vector<8x32xf32>
    %114 = arith.mulf %109, %111 : vector<8x32xf32>
    %115 = arith.addf %113, %114 : vector<8x32xf32>
    %116 = math.tanh %115 : vector<8x32xf32>
    %117 = arith.mulf %112, %116 : vector<8x32xf32>
    %c40 = arith.constant 40 : index
    %c0_31 = arith.constant 0 : index
    %118 = vector.load %arg6[%c40, %c0_31] : memref<64x128xf32, #tpu.memory_space<vmem>>, vector<8x128xf32>
    %cst_32 = arith.constant dense<0.000000e+00> : vector<8x128xf32>
    %119 = tpu.matmul %117, %7, %cst_32 {dimension_numbers = #tpu.dot_dimension_numbers<[1], [0], [0], [1], [0, 0, 1, 1], [], []>} : vector<8x32xf32>, vector<32x128xf32>, vector<8x128xf32> -> vector<8x128xf32>
    %120 = arith.addf %118, %119 : vector<8x128xf32>
    %121 = math.tanh %120 : vector<8x128xf32>
    %122 = arith.negf %120 : vector<8x128xf32>
    %123 = math.exp %122 : vector<8x128xf32>
    %cst_33 = arith.constant 1.000000e+00 : f32
    %124 = vector.broadcast %cst_33 : f32 to vector<8x128xf32>
    %125 = arith.addf %124, %123 : vector<8x128xf32>
    %126 = arith.divf %124, %125 : vector<8x128xf32>
    %127 = arith.select %14, %121, %126 : vector<8x128xi1>, vector<8x128xf32>
    %128 = vector.extract_strided_slice %127 {offsets = [0, 0], sizes = [8, 32], strides = [1, 1]} : vector<8x128xf32> to vector<8x32xf32>
    %129 = vector.extract_strided_slice %127 {offsets = [0, 32], sizes = [8, 32], strides = [1, 1]} : vector<8x128xf32> to vector<8x32xf32>
    %130 = vector.extract_strided_slice %127 {offsets = [0, 64], sizes = [8, 32], strides = [1, 1]} : vector<8x128xf32> to vector<8x32xf32>
    %131 = vector.extract_strided_slice %127 {offsets = [0, 96], sizes = [8, 32], strides = [1, 1]} : vector<8x128xf32> to vector<8x32xf32>
    %132 = arith.mulf %129, %115 : vector<8x32xf32>
    %133 = arith.mulf %128, %130 : vector<8x32xf32>
    %134 = arith.addf %132, %133 : vector<8x32xf32>
    %135 = math.tanh %134 : vector<8x32xf32>
    %136 = arith.mulf %131, %135 : vector<8x32xf32>
    %c48 = arith.constant 48 : index
    %c0_34 = arith.constant 0 : index
    %137 = vector.load %arg6[%c48, %c0_34] : memref<64x128xf32, #tpu.memory_space<vmem>>, vector<8x128xf32>
    %cst_35 = arith.constant dense<0.000000e+00> : vector<8x128xf32>
    %138 = tpu.matmul %136, %7, %cst_35 {dimension_numbers = #tpu.dot_dimension_numbers<[1], [0], [0], [1], [0, 0, 1, 1], [], []>} : vector<8x32xf32>, vector<32x128xf32>, vector<8x128xf32> -> vector<8x128xf32>
    %139 = arith.addf %137, %138 : vector<8x128xf32>
    %140 = math.tanh %139 : vector<8x128xf32>
    %141 = arith.negf %139 : vector<8x128xf32>
    %142 = math.exp %141 : vector<8x128xf32>
    %cst_36 = arith.constant 1.000000e+00 : f32
    %143 = vector.broadcast %cst_36 : f32 to vector<8x128xf32>
    %144 = arith.addf %143, %142 : vector<8x128xf32>
    %145 = arith.divf %143, %144 : vector<8x128xf32>
    %146 = arith.select %14, %140, %145 : vector<8x128xi1>, vector<8x128xf32>
    %147 = vector.extract_strided_slice %146 {offsets = [0, 0], sizes = [8, 32], strides = [1, 1]} : vector<8x128xf32> to vector<8x32xf32>
    %148 = vector.extract_strided_slice %146 {offsets = [0, 32], sizes = [8, 32], strides = [1, 1]} : vector<8x128xf32> to vector<8x32xf32>
    %149 = vector.extract_strided_slice %146 {offsets = [0, 64], sizes = [8, 32], strides = [1, 1]} : vector<8x128xf32> to vector<8x32xf32>
    %150 = vector.extract_strided_slice %146 {offsets = [0, 96], sizes = [8, 32], strides = [1, 1]} : vector<8x128xf32> to vector<8x32xf32>
    %151 = arith.mulf %148, %134 : vector<8x32xf32>
    %152 = arith.mulf %147, %149 : vector<8x32xf32>
    %153 = arith.addf %151, %152 : vector<8x32xf32>
    %154 = math.tanh %153 : vector<8x32xf32>
    %155 = arith.mulf %150, %154 : vector<8x32xf32>
    %c56 = arith.constant 56 : index
    %c0_37 = arith.constant 0 : index
    %156 = vector.load %arg6[%c56, %c0_37] : memref<64x128xf32, #tpu.memory_space<vmem>>, vector<8x128xf32>
    %cst_38 = arith.constant dense<0.000000e+00> : vector<8x128xf32>
    %157 = tpu.matmul %155, %7, %cst_38 {dimension_numbers = #tpu.dot_dimension_numbers<[1], [0], [0], [1], [0, 0, 1, 1], [], []>} : vector<8x32xf32>, vector<32x128xf32>, vector<8x128xf32> -> vector<8x128xf32>
    %158 = arith.addf %156, %157 : vector<8x128xf32>
    %159 = math.tanh %158 : vector<8x128xf32>
    %160 = arith.negf %158 : vector<8x128xf32>
    %161 = math.exp %160 : vector<8x128xf32>
    %cst_39 = arith.constant 1.000000e+00 : f32
    %162 = vector.broadcast %cst_39 : f32 to vector<8x128xf32>
    %163 = arith.addf %162, %161 : vector<8x128xf32>
    %164 = arith.divf %162, %163 : vector<8x128xf32>
    %165 = arith.select %14, %159, %164 : vector<8x128xi1>, vector<8x128xf32>
    %166 = vector.extract_strided_slice %165 {offsets = [0, 0], sizes = [8, 32], strides = [1, 1]} : vector<8x128xf32> to vector<8x32xf32>
    %167 = vector.extract_strided_slice %165 {offsets = [0, 32], sizes = [8, 32], strides = [1, 1]} : vector<8x128xf32> to vector<8x32xf32>
    %168 = vector.extract_strided_slice %165 {offsets = [0, 64], sizes = [8, 32], strides = [1, 1]} : vector<8x128xf32> to vector<8x32xf32>
    %169 = vector.extract_strided_slice %165 {offsets = [0, 96], sizes = [8, 32], strides = [1, 1]} : vector<8x128xf32> to vector<8x32xf32>
    %170 = arith.mulf %167, %153 : vector<8x32xf32>
    %171 = arith.mulf %166, %168 : vector<8x32xf32>
    %172 = arith.addf %170, %171 : vector<8x32xf32>
    %173 = math.tanh %172 : vector<8x32xf32>
    %174 = arith.mulf %169, %173 : vector<8x32xf32>
    %cst_40 = arith.constant dense<0.000000e+00> : vector<8x128xf32>
    %175 = tpu.matmul %174, %8, %cst_40 {dimension_numbers = #tpu.dot_dimension_numbers<[1], [0], [0], [1], [0, 0, 1, 1], [], []>} : vector<8x32xf32>, vector<32x128xf32>, vector<8x128xf32> -> vector<8x128xf32>
    %176 = arith.addf %175, %5 : vector<8x128xf32>
    %cst_41 = arith.constant 0.000000e+00 : f32
    %177 = vector.broadcast %cst_41 : f32 to vector<8x128xf32>
    %178 = arith.maximumf %176, %177 : vector<8x128xf32>
    %c0_42 = arith.constant 0 : index
    %c0_43 = arith.constant 0 : index
    %c0_44 = arith.constant 0 : index
    %179 = vector.load %arg5[%c0_42, %c0_43, %c0_44] : memref<4x8x128xf32, #tpu.memory_space<vmem>>, vector<1x8x128xf32>
    %180 = vector.shape_cast %179 : vector<1x8x128xf32> to vector<8x128xf32>
    %181 = vector.shape_cast %178 : vector<8x128xf32> to vector<1x8x128xf32>
    tpu.vector_store %arg5[%c0_42, %c0_43, %c0_44], %181 {strides = array<i32>} : memref<4x8x128xf32, #tpu.memory_space<vmem>>, vector<1x8x128xf32>,
    %182 = vector.extract_strided_slice %178 {offsets = [0, 0], sizes = [8, 8], strides = [1, 1]} : vector<8x128xf32> to vector<8x8xf32>
    %cst_45 = arith.constant dense<0.000000e+00> : vector<8x128xf32>
    %183 = tpu.matmul %182, %6, %cst_45 {dimension_numbers = #tpu.dot_dimension_numbers<[1], [0], [0], [1], [0, 0, 1, 1], [], []>} : vector<8x8xf32>, vector<8x128xf32>, vector<8x128xf32> -> vector<8x128xf32>
    %cst_46 = arith.constant dense<0.000000e+00> : vector<8x128xf32>
    %184 = tpu.matmul %174, %7, %cst_46 {dimension_numbers = #tpu.dot_dimension_numbers<[1], [0], [0], [1], [0, 0, 1, 1], [], []>} : vector<8x32xf32>, vector<32x128xf32>, vector<8x128xf32> -> vector<8x128xf32>
    %185 = arith.addf %183, %184 : vector<8x128xf32>
    %186 = arith.addf %185, %2 : vector<8x128xf32>
    %187 = math.tanh %186 : vector<8x128xf32>
    %188 = arith.negf %186 : vector<8x128xf32>
    %189 = math.exp %188 : vector<8x128xf32>
    %cst_47 = arith.constant 1.000000e+00 : f32
    %190 = vector.broadcast %cst_47 : f32 to vector<8x128xf32>
    %191 = arith.addf %190, %189 : vector<8x128xf32>
    %192 = arith.divf %190, %191 : vector<8x128xf32>
    %193 = arith.select %14, %187, %192 : vector<8x128xi1>, vector<8x128xf32>
    %194 = vector.extract_strided_slice %193 {offsets = [0, 0], sizes = [8, 32], strides = [1, 1]} : vector<8x128xf32> to vector<8x32xf32>
    %195 = vector.extract_strided_slice %193 {offsets = [0, 32], sizes = [8, 32], strides = [1, 1]} : vector<8x128xf32> to vector<8x32xf32>
    %196 = vector.extract_strided_slice %193 {offsets = [0, 64], sizes = [8, 32], strides = [1, 1]} : vector<8x128xf32> to vector<8x32xf32>
    %197 = vector.extract_strided_slice %193 {offsets = [0, 96], sizes = [8, 32], strides = [1, 1]} : vector<8x128xf32> to vector<8x32xf32>
    %198 = arith.mulf %195, %172 : vector<8x32xf32>
    %199 = arith.mulf %194, %196 : vector<8x32xf32>
    %200 = arith.addf %198, %199 : vector<8x32xf32>
    %201 = math.tanh %200 : vector<8x32xf32>
    %202 = arith.mulf %197, %201 : vector<8x32xf32>
    %cst_48 = arith.constant dense<0.000000e+00> : vector<8x128xf32>
    %203 = tpu.matmul %202, %8, %cst_48 {dimension_numbers = #tpu.dot_dimension_numbers<[1], [0], [0], [1], [0, 0, 1, 1], [], []>} : vector<8x32xf32>, vector<32x128xf32>, vector<8x128xf32> -> vector<8x128xf32>
    %204 = arith.addf %203, %5 : vector<8x128xf32>
    %cst_49 = arith.constant 0.000000e+00 : f32
    %205 = vector.broadcast %cst_49 : f32 to vector<8x128xf32>
    %206 = arith.maximumf %204, %205 : vector<8x128xf32>
    %c1 = arith.constant 1 : index
    %c0_50 = arith.constant 0 : index
    %c0_51 = arith.constant 0 : index
    %207 = vector.load %arg5[%c1, %c0_50, %c0_51] : memref<4x8x128xf32, #tpu.memory_space<vmem>>, vector<1x8x128xf32>
    %208 = vector.shape_cast %207 : vector<1x8x128xf32> to vector<8x128xf32>
    %209 = vector.shape_cast %206 : vector<8x128xf32> to vector<1x8x128xf32>
    tpu.vector_store %arg5[%c1, %c0_50, %c0_51], %209 {strides = array<i32>} : memref<4x8x128xf32, #tpu.memory_space<vmem>>, vector<1x8x128xf32>,
    %210 = vector.extract_strided_slice %206 {offsets = [0, 0], sizes = [8, 8], strides = [1, 1]} : vector<8x128xf32> to vector<8x8xf32>
    %cst_52 = arith.constant dense<0.000000e+00> : vector<8x128xf32>
    %211 = tpu.matmul %210, %6, %cst_52 {dimension_numbers = #tpu.dot_dimension_numbers<[1], [0], [0], [1], [0, 0, 1, 1], [], []>} : vector<8x8xf32>, vector<8x128xf32>, vector<8x128xf32> -> vector<8x128xf32>
    %cst_53 = arith.constant dense<0.000000e+00> : vector<8x128xf32>
    %212 = tpu.matmul %202, %7, %cst_53 {dimension_numbers = #tpu.dot_dimension_numbers<[1], [0], [0], [1], [0, 0, 1, 1], [], []>} : vector<8x32xf32>, vector<32x128xf32>, vector<8x128xf32> -> vector<8x128xf32>
    %213 = arith.addf %211, %212 : vector<8x128xf32>
    %214 = arith.addf %213, %2 : vector<8x128xf32>
    %215 = math.tanh %214 : vector<8x128xf32>
    %216 = arith.negf %214 : vector<8x128xf32>
    %217 = math.exp %216 : vector<8x128xf32>
    %cst_54 = arith.constant 1.000000e+00 : f32
    %218 = vector.broadcast %cst_54 : f32 to vector<8x128xf32>
    %219 = arith.addf %218, %217 : vector<8x128xf32>
    %220 = arith.divf %218, %219 : vector<8x128xf32>
    %221 = arith.select %14, %215, %220 : vector<8x128xi1>, vector<8x128xf32>
    %222 = vector.extract_strided_slice %221 {offsets = [0, 0], sizes = [8, 32], strides = [1, 1]} : vector<8x128xf32> to vector<8x32xf32>
    %223 = vector.extract_strided_slice %221 {offsets = [0, 32], sizes = [8, 32], strides = [1, 1]} : vector<8x128xf32> to vector<8x32xf32>
    %224 = vector.extract_strided_slice %221 {offsets = [0, 64], sizes = [8, 32], strides = [1, 1]} : vector<8x128xf32> to vector<8x32xf32>
    %225 = vector.extract_strided_slice %221 {offsets = [0, 96], sizes = [8, 32], strides = [1, 1]} : vector<8x128xf32> to vector<8x32xf32>
    %226 = arith.mulf %223, %200 : vector<8x32xf32>
    %227 = arith.mulf %222, %224 : vector<8x32xf32>
    %228 = arith.addf %226, %227 : vector<8x32xf32>
    %229 = math.tanh %228 : vector<8x32xf32>
    %230 = arith.mulf %225, %229 : vector<8x32xf32>
    %cst_55 = arith.constant dense<0.000000e+00> : vector<8x128xf32>
    %231 = tpu.matmul %230, %8, %cst_55 {dimension_numbers = #tpu.dot_dimension_numbers<[1], [0], [0], [1], [0, 0, 1, 1], [], []>} : vector<8x32xf32>, vector<32x128xf32>, vector<8x128xf32> -> vector<8x128xf32>
    %232 = arith.addf %231, %5 : vector<8x128xf32>
    %cst_56 = arith.constant 0.000000e+00 : f32
    %233 = vector.broadcast %cst_56 : f32 to vector<8x128xf32>
    %234 = arith.maximumf %232, %233 : vector<8x128xf32>
    %c2 = arith.constant 2 : index
    %c0_57 = arith.constant 0 : index
    %c0_58 = arith.constant 0 : index
    %235 = vector.load %arg5[%c2, %c0_57, %c0_58] : memref<4x8x128xf32, #tpu.memory_space<vmem>>, vector<1x8x128xf32>
    %236 = vector.shape_cast %235 : vector<1x8x128xf32> to vector<8x128xf32>
    %237 = vector.shape_cast %234 : vector<8x128xf32> to vector<1x8x128xf32>
    tpu.vector_store %arg5[%c2, %c0_57, %c0_58], %237 {strides = array<i32>} : memref<4x8x128xf32, #tpu.memory_space<vmem>>, vector<1x8x128xf32>,
    %238 = vector.extract_strided_slice %234 {offsets = [0, 0], sizes = [8, 8], strides = [1, 1]} : vector<8x128xf32> to vector<8x8xf32>
    %cst_59 = arith.constant dense<0.000000e+00> : vector<8x128xf32>
    %239 = tpu.matmul %238, %6, %cst_59 {dimension_numbers = #tpu.dot_dimension_numbers<[1], [0], [0], [1], [0, 0, 1, 1], [], []>} : vector<8x8xf32>, vector<8x128xf32>, vector<8x128xf32> -> vector<8x128xf32>
    %cst_60 = arith.constant dense<0.000000e+00> : vector<8x128xf32>
    %240 = tpu.matmul %230, %7, %cst_60 {dimension_numbers = #tpu.dot_dimension_numbers<[1], [0], [0], [1], [0, 0, 1, 1], [], []>} : vector<8x32xf32>, vector<32x128xf32>, vector<8x128xf32> -> vector<8x128xf32>
    %241 = arith.addf %239, %240 : vector<8x128xf32>
    %242 = arith.addf %241, %2 : vector<8x128xf32>
    %243 = math.tanh %242 : vector<8x128xf32>
    %244 = arith.negf %242 : vector<8x128xf32>
    %245 = math.exp %244 : vector<8x128xf32>
    %cst_61 = arith.constant 1.000000e+00 : f32
    %246 = vector.broadcast %cst_61 : f32 to vector<8x128xf32>
    %247 = arith.addf %246, %245 : vector<8x128xf32>
    %248 = arith.divf %246, %247 : vector<8x128xf32>
    %249 = arith.select %14, %243, %248 : vector<8x128xi1>, vector<8x128xf32>
    %250 = vector.extract_strided_slice %249 {offsets = [0, 0], sizes = [8, 32], strides = [1, 1]} : vector<8x128xf32> to vector<8x32xf32>
    %251 = vector.extract_strided_slice %249 {offsets = [0, 32], sizes = [8, 32], strides = [1, 1]} : vector<8x128xf32> to vector<8x32xf32>
    %252 = vector.extract_strided_slice %249 {offsets = [0, 64], sizes = [8, 32], strides = [1, 1]} : vector<8x128xf32> to vector<8x32xf32>
    %253 = vector.extract_strided_slice %249 {offsets = [0, 96], sizes = [8, 32], strides = [1, 1]} : vector<8x128xf32> to vector<8x32xf32>
    %254 = arith.mulf %251, %228 : vector<8x32xf32>
    %255 = arith.mulf %250, %252 : vector<8x32xf32>
    %256 = arith.addf %254, %255 : vector<8x32xf32>
    %257 = math.tanh %256 : vector<8x32xf32>
    %258 = arith.mulf %253, %257 : vector<8x32xf32>
    %cst_62 = arith.constant dense<0.000000e+00> : vector<8x128xf32>
    %259 = tpu.matmul %258, %8, %cst_62 {dimension_numbers = #tpu.dot_dimension_numbers<[1], [0], [0], [1], [0, 0, 1, 1], [], []>} : vector<8x32xf32>, vector<32x128xf32>, vector<8x128xf32> -> vector<8x128xf32>
    %260 = arith.addf %259, %5 : vector<8x128xf32>
    %cst_63 = arith.constant 0.000000e+00 : f32
    %261 = vector.broadcast %cst_63 : f32 to vector<8x128xf32>
    %262 = arith.maximumf %260, %261 : vector<8x128xf32>
    %c3 = arith.constant 3 : index
    %c0_64 = arith.constant 0 : index
    %c0_65 = arith.constant 0 : index
    %263 = vector.load %arg5[%c3, %c0_64, %c0_65] : memref<4x8x128xf32, #tpu.memory_space<vmem>>, vector<1x8x128xf32>
    %264 = vector.shape_cast %263 : vector<1x8x128xf32> to vector<8x128xf32>
    %265 = vector.shape_cast %262 : vector<8x128xf32> to vector<1x8x128xf32>
    tpu.vector_store %arg5[%c3, %c0_64, %c0_65], %265 {strides = array<i32>} : memref<4x8x128xf32, #tpu.memory_space<vmem>>, vector<1x8x128xf32>,
    return
  }
}

</mosaic_0001>

<llo_original>
// kernel: tpu_custom_call.1
$region0: #{tpu_custom_call.1}
  #allocation0 [shape = 'u32[]', space=smem, size = 0x4, offset = 0x4, fixed_abs, tag = 'smem constant byte address 0x4 - core index']
  #allocation1 [shape = 'u32[72,128]{1,0:T(1,128)}', space=vmem, size = 0x9000, scoped, tag = 'internal scratch']
  #allocation2 [shape = 'f32[64,128]{1,0:T(8,128)}', space=vmem, size = 0x8000, scoped, tag = 'scratch operand']
  %s0 = inlined_call_operand.vmem [shape: f32[64,8], index: 0, kind: input, shape index: {}]
  %s1 = inlined_call_operand.vmem [shape: f32[40,128], index: 1, kind: input, shape index: {}]
  %s2 = inlined_call_operand.vmem [shape: f32[1,128], index: 2, kind: input, shape index: {}]
  %s3 = inlined_call_operand.vmem [shape: f32[32,128], index: 3, kind: input, shape index: {}]
  %s4 = inlined_call_operand.vmem [shape: f32[1,128], index: 4, kind: input, shape index: {}]
  %s5 = inlined_call_operand.hbm [shape: f32[4,8,128], index: 5, kind: output, shape index: {}]
  %s6 = sld [smem:[#allocation0]]
  $region30: #{tpu_custom_call.1} parent=0
    _
  %s8 = ssub.s32 1, %s6
  %s9 = scalar_select 0, %s8, %s6
  $region1: #{tpu_custom_call.1} parent=0
    #allocation3 [shape = 'u8[16384]{0}', space=vmem, size = 0x4000, scoped, tag = 'output window, operand 0, single buffered']
    #allocation4 [shape = 's32[1]{0}', space=sflag, size = 0x4, scoped, tag = 'scoped memory for tpu_custom_call.1']
    %10 = vsyncpa [#allocation4], 0
    // Predicated region
    $region2: #{tpu_custom_call.1} parent=1 // pred_check
      _
    $region3: #{tpu_custom_call.1} parent=1 // pred_check_branch
      %12 = sbr.rel (0) target = $region5
    $region4: #{tpu_custom_call.1} parent=1 // pred_region
      _
    $region5: #{tpu_custom_call.1} parent=1 // pred_fallthru
      _
    // Predicated region
    $region6: #{tpu_custom_call.1} parent=1 // pred_check
      _
    $region7: #{tpu_custom_call.1} parent=1 // pred_check_branch
      %14 = sbr.rel (0) target = $region9
    $region8: #{tpu_custom_call.1} parent=1 // pred_region
      _
    $region9: #{tpu_custom_call.1} parent=1 // pred_fallthru
      _
    // Predicated region
    $region10: #{tpu_custom_call.1} parent=1 // pred_check
      _
    $region11: #{tpu_custom_call.1} parent=1 // pred_check_branch
      %16 = sbr.rel (0) target = $region13
    $region12: #{tpu_custom_call.1} parent=1 // pred_region
      _
    $region13: #{tpu_custom_call.1} parent=1 // pred_fallthru
      _
    // Predicated region
    $region14: #{tpu_custom_call.1} parent=1 // pred_check
      _
    $region15: #{tpu_custom_call.1} parent=1 // pred_check_branch
      %18 = sbr.rel (0) target = $region17
    $region16: #{tpu_custom_call.1} parent=1 // pred_region
      _
    $region17: #{tpu_custom_call.1} parent=1 // pred_fallthru
      _
    // Predicated region
    $region18: #{tpu_custom_call.1} parent=1 // pred_check
      _
    $region19: #{tpu_custom_call.1} parent=1 // pred_check_branch
      %20 = sbr.rel (0) target = $region21
    $region20: #{tpu_custom_call.1} parent=1 // pred_region
      _
    $region21: #{tpu_custom_call.1} parent=1 // pred_fallthru
      _
    %v21 = vld [vmem:[%s2] sm:$0x1]
    %v23 = vperm.slane %v21, 0
    %v25 = vld [vmem:[%s4] sm:$0x1]
    %v27 = vperm.slane %v25, 0
    %v29 = vld [vmem:[%s1] sm:$0xff]
    %v30 = vld [vmem:[%s1 + $0x8] sm:$0xff]
    %v31 = vld [vmem:[%s1 + $0x10] sm:$0xff]
    %v32 = vld [vmem:[%s1 + $0x18] sm:$0xff]
    %v33 = vld [vmem:[%s1 + $0x20] sm:$0xff]
    %v34 = vld [vmem:[%s3] sm:$0xff]
    %v35 = vld [vmem:[%s3 + $0x8] sm:$0xff]
    %v36 = vld [vmem:[%s3 + $0x10] sm:$0xff]
    %v37 = vld [vmem:[%s3 + $0x18] sm:$0xff]
    %v38 = vlaneseq
    %v39 = vand.u32 %v38, 127
    %vm40 = vcmp.ge.s32.totalorder %v39, 64
    %vm41 = vcmp.lt.s32.totalorder %v39, 96
    %vm42 = vmand %vm40, %vm41
    %v43 = vld [vmem:[%s0] sm:$0xff]
    %v44 = vld [vmem:[%s0 + $0x8] sm:$0xff]
    %v45 = vld [vmem:[%s0 + $0x10] sm:$0xff]
    %v46 = vld [vmem:[%s0 + $0x18] sm:$0xff]
    %v47 = vld [vmem:[%s0 + $0x20] sm:$0xff]
    %v48 = vld [vmem:[%s0 + $0x28] sm:$0xff]
    %v49 = vld [vmem:[%s0 + $0x30] sm:$0xff]
    %v50 = vld [vmem:[%s0 + $0x38] sm:$0xff]
    %vm51 = vcmask 64512
    %v53 = vsel %vm51, %v43, 0
    %v56 = vsel %vm51, %v44, 0
    %v59 = vsel %vm51, %v45, 0
    %v62 = vsel %vm51, %v46, 0
    %v65 = vsel %vm51, %v47, 0
    %v68 = vsel %vm51, %v48, 0
    %v71 = vsel %vm51, %v49, 0
    %v74 = vsel %vm51, %v50, 0
    %76 = vmatpush.msra.mxu0 0.0
    %77 = vmatpush.msra.mxu0 0.0
    %78 = vmatpush.msra.mxu0 0.0
    %79 = vmatpush.msra.mxu0 0.0
    %80 = vmatpush.msra.mxu0 0.0
    %81 = vmatpush.msra.mxu0 0.0
    %82 = vmatpush.msra.mxu0 0.0
    %83 = vmatpush.msra.mxu0 0.0
    %84 = vmatpush.msra.mxu0 0.0
    %85 = vmatpush.msra.mxu0 0.0
    %86 = vmatpush.msra.mxu0 0.0
    %87 = vmatpush.msra.mxu0 0.0
    %88 = vmatpush.msra.mxu0 0.0
    %89 = vmatpush.msra.mxu0 0.0
    %90 = vmatpush.msra.mxu0 0.0
    %91 = vmatpush.msra.mxu0 %v29
    %92 = vmatmul.f32.gmra.mxu0 %v53
    %v93 = vpop.f32.mrf.mxu0
    %v94 = vadd.f32 %v23, %v93
    %95 = vmatmul.f32.gmra.mxu0 %v56
    %v96 = vpop.f32.mrf.mxu0
    %v97 = vadd.f32 %v23, %v96
    %98 = vmatmul.f32.gmra.mxu0 %v59
    %v99 = vpop.f32.mrf.mxu0
    %v100 = vadd.f32 %v23, %v99
    %101 = vmatmul.f32.gmra.mxu0 %v62
    %v102 = vpop.f32.mrf.mxu0
    %v103 = vadd.f32 %v23, %v102
    %104 = vmatmul.f32.gmra.mxu0 %v65
    %v105 = vpop.f32.mrf.mxu0
    %v106 = vadd.f32 %v23, %v105
    %107 = vmatmul.f32.gmra.mxu0 %v68
    %v108 = vpop.f32.mrf.mxu0
    %v109 = vadd.f32 %v23, %v108
    %110 = vmatmul.f32.gmra.mxu0 %v71
    %v111 = vpop.f32.mrf.mxu0
    %v112 = vadd.f32 %v23, %v111
    %113 = vmatmul.f32.gmra.mxu0 %v74
    %v114 = vpop.f32.mrf.mxu0
    %v115 = vadd.f32 %v23, %v114
    %116 = vdwg.mxu0
    %117 = vst [vmem:[#allocation2] sm:$0xff] %v94
    %118 = vst [vmem:[#allocation2 + $0x8] sm:$0xff] %v97
    %119 = vst [vmem:[#allocation2 + $0x10] sm:$0xff] %v100
    %120 = vst [vmem:[#allocation2 + $0x18] sm:$0xff] %v103
    %121 = vst [vmem:[#allocation2 + $0x20] sm:$0xff] %v106
    %122 = vst [vmem:[#allocation2 + $0x28] sm:$0xff] %v109
    %123 = vst [vmem:[#allocation2 + $0x30] sm:$0xff] %v112
    %124 = vst [vmem:[#allocation2 + $0x38] sm:$0xff] %v115
    %v125 = vld [vmem:[#allocation2] sm:$0xff]
    %vm126 = vcmask 261120
    %v128 = vsel %vm126, 0.0, 0
    %130 = vmatpush.msra.mxu0 0.0
    %131 = vmatpush.msra.mxu0 0.0
    %132 = vmatpush.msra.mxu0 0.0
    %133 = vmatpush.msra.mxu0 0.0
    %134 = vmatpush.msra.mxu0 0.0
    %135 = vmatpush.msra.mxu0 0.0
    %136 = vmatpush.msra.mxu0 0.0
    %137 = vmatpush.msra.mxu0 0.0
    %138 = vmatpush.msra.mxu0 0.0
    %139 = vmatpush.msra.mxu0 0.0
    %140 = vmatpush.msra.mxu0 0.0
    %141 = vmatpush.msra.mxu0 0.0
    %142 = vmatpush.msra.mxu0 %v33
    %143 = vmatpush.msra.mxu0 %v32
    %144 = vmatpush.msra.mxu0 %v31
    %145 = vmatpush.msra.mxu0 %v30
    %146 = vmatmul.f32.gmra.mxu0 %v128
    %v147 = vpop.f32.mrf.mxu0
    %v148 = vadd.f32 0.0, %v147
    %149 = vdwg.mxu0
    %v150 = vadd.f32 %v125, %v148
    %v151 = vtanh.pop %v150
    %v152 = vxor.u32 %v150, 2147483648
    %v153 = vmul.f32 %v152, 1.442695
    %v154 = vpow.pop %v153
    %v155 = vadd.f32 %v154, 1.0
    %v156 = vrcp.pop %v155
    %v157 = vmul.f32 %v155, %v156
    %v158 = vsub.f32 1.0, %v157
    %v159 = vmul.f32 %v156, %v158
    %v160 = vadd.f32 %v156, %v159
    %vm161 = vweird.f32 %v155
    %vm162 = vweird.f32 %v156
    %vm163 = vmor %vm161, %vm162
    %v164 = vsel %vm163, %v156, %v160
    %v165 = vand.u32 2147483647, %v155
    %vm166 = vcmp.eq.f32.partialorder %v165, 8.507059e+37
    %v167 = vand.u32 %v155, 2147483648
    %v168 = vor.u32 1.1754944e-38, %v167
    %v169 = vsel %vm166, %v168, %v164
    %v170 = vmul.f32 1.0, %v169
    %v171 = vsel %vm42, %v151, %v170
    %v172 = vmul.f32 %v171, 0.0
    %174 = vrot.lane.b32.xlu0 %v171, 64
    %v175 = vpop.permute.xlu0 %174
    %v177 = vmul.f32 %v171, %v175
    %179 = vrot.lane.b32.xlu0 %v177, 32
    %v180 = vpop.permute.xlu0 %179
    %v182 = vadd.f32 %v172, %v180
    %v183 = vtanh.pop %v182
    %185 = vrot.lane.b32.xlu0 %v183, 64
    %v186 = vpop.permute.xlu0 %185
    %v188 = vmul.f32 %v171, %v186
    %v189 = vld [vmem:[#allocation2 + $0x8] sm:$0xff]
    %191 = vrot.lane.b32.xlu0 %v188, 32
    %v192 = vpop.permute.xlu0 %191
    %v193 = vsel %vm126, %v192, 0
    %195 = vmatpush.msra.mxu0 0.0
    %196 = vmatpush.msra.mxu0 0.0
    %197 = vmatpush.msra.mxu0 0.0
    %198 = vmatpush.msra.mxu0 0.0
    %199 = vmatpush.msra.mxu0 0.0
    %200 = vmatpush.msra.mxu0 0.0
    %201 = vmatpush.msra.mxu0 0.0
    %202 = vmatpush.msra.mxu0 0.0
    %203 = vmatpush.msra.mxu0 0.0
    %204 = vmatpush.msra.mxu0 0.0
    %205 = vmatpush.msra.mxu0 0.0
    %206 = vmatpush.msra.mxu0 0.0
    %207 = vmatpush.msra.mxu0 %v33
    %208 = vmatpush.msra.mxu0 %v32
    %209 = vmatpush.msra.mxu0 %v31
    %210 = vmatpush.msra.mxu0 %v30
    %211 = vmatmul.f32.gmra.mxu0 %v193
    %v212 = vpop.f32.mrf.mxu0
    %v213 = vadd.f32 0.0, %v212
    %214 = vdwg.mxu0
    %v215 = vadd.f32 %v189, %v213
    %v216 = vtanh.pop %v215
    %v217 = vxor.u32 %v215, 2147483648
    %v218 = vmul.f32 %v217, 1.442695
    %v219 = vpow.pop %v218
    %v220 = vadd.f32 %v219, 1.0
    %v221 = vrcp.pop %v220
    %v222 = vmul.f32 %v220, %v221
    %v223 = vsub.f32 1.0, %v222
    %v224 = vmul.f32 %v221, %v223
    %v225 = vadd.f32 %v221, %v224
    %vm226 = vweird.f32 %v220
    %vm227 = vweird.f32 %v221
    %vm228 = vmor %vm226, %vm227
    %v229 = vsel %vm228, %v221, %v225
    %v230 = vand.u32 2147483647, %v220
    %vm231 = vcmp.eq.f32.partialorder %v230, 8.507059e+37
    %v232 = vand.u32 %v220, 2147483648
    %v233 = vor.u32 1.1754944e-38, %v232
    %v234 = vsel %vm231, %v233, %v229
    %v235 = vmul.f32 1.0, %v234
    %v236 = vsel %vm42, %v216, %v235
    %v237 = vmul.f32 %v236, %v182
    %239 = vrot.lane.b32.xlu0 %v236, 64
    %v240 = vpop.permute.xlu0 %239
    %v242 = vmul.f32 %v236, %v240
    %244 = vrot.lane.b32.xlu0 %v242, 32
    %v245 = vpop.permute.xlu0 %244
    %v247 = vadd.f32 %v237, %v245
    %v248 = vtanh.pop %v247
    %250 = vrot.lane.b32.xlu0 %v248, 64
    %v251 = vpop.permute.xlu0 %250
    %v253 = vmul.f32 %v236, %v251
    %v254 = vld [vmem:[#allocation2 + $0x10] sm:$0xff]
    %256 = vrot.lane.b32.xlu0 %v253, 32
    %v257 = vpop.permute.xlu0 %256
    %v258 = vsel %vm126, %v257, 0
    %260 = vmatpush.msra.mxu0 0.0
    %261 = vmatpush.msra.mxu0 0.0
    %262 = vmatpush.msra.mxu0 0.0
    %263 = vmatpush.msra.mxu0 0.0
    %264 = vmatpush.msra.mxu0 0.0
    %265 = vmatpush.msra.mxu0 0.0
    %266 = vmatpush.msra.mxu0 0.0
    %267 = vmatpush.msra.mxu0 0.0
    %268 = vmatpush.msra.mxu0 0.0
    %269 = vmatpush.msra.mxu0 0.0
    %270 = vmatpush.msra.mxu0 0.0
    %271 = vmatpush.msra.mxu0 0.0
    %272 = vmatpush.msra.mxu0 %v33
    %273 = vmatpush.msra.mxu0 %v32
    %274 = vmatpush.msra.mxu0 %v31
    %275 = vmatpush.msra.mxu0 %v30
    %276 = vmatmul.f32.gmra.mxu0 %v258
    %v277 = vpop.f32.mrf.mxu0
    %v278 = vadd.f32 0.0, %v277
    %279 = vdwg.mxu0
    %v280 = vadd.f32 %v254, %v278
    %v281 = vtanh.pop %v280
    %v282 = vxor.u32 %v280, 2147483648
    %v283 = vmul.f32 %v282, 1.442695
    %v284 = vpow.pop %v283
    %v285 = vadd.f32 %v284, 1.0
    %v286 = vrcp.pop %v285
    %v287 = vmul.f32 %v285, %v286
    %v288 = vsub.f32 1.0, %v287
    %v289 = vmul.f32 %v286, %v288
    %v290 = vadd.f32 %v286, %v289
    %vm291 = vweird.f32 %v285
    %vm292 = vweird.f32 %v286
    %vm293 = vmor %vm291, %vm292
    %v294 = vsel %vm293, %v286, %v290
    %v295 = vand.u32 2147483647, %v285
    %vm296 = vcmp.eq.f32.partialorder %v295, 8.507059e+37
    %v297 = vand.u32 %v285, 2147483648
    %v298 = vor.u32 1.1754944e-38, %v297
    %v299 = vsel %vm296, %v298, %v294
    %v300 = vmul.f32 1.0, %v299
    %v301 = vsel %vm42, %v281, %v300
    %v302 = vmul.f32 %v301, %v247
    %304 = vrot.lane.b32.xlu0 %v301, 64
    %v305 = vpop.permute.xlu0 %304
    %v307 = vmul.f32 %v301, %v305
    %309 = vrot.lane.b32.xlu0 %v307, 32
    %v310 = vpop.permute.xlu0 %309
    %v312 = vadd.f32 %v302, %v310
    %v313 = vtanh.pop %v312
    %315 = vrot.lane.b32.xlu0 %v313, 64
    %v316 = vpop.permute.xlu0 %315
    %v318 = vmul.f32 %v301, %v316
    %v319 = vld [vmem:[#allocation2 + $0x18] sm:$0xff]
    %321 = vrot.lane.b32.xlu0 %v318, 32
    %v322 = vpop.permute.xlu0 %321
    %v323 = vsel %vm126, %v322, 0
    %325 = vmatpush.msra.mxu0 0.0
    %326 = vmatpush.msra.mxu0 0.0
    %327 = vmatpush.msra.mxu0 0.0
    %328 = vmatpush.msra.mxu0 0.0
    %329 = vmatpush.msra.mxu0 0.0
    %330 = vmatpush.msra.mxu0 0.0
    %331 = vmatpush.msra.mxu0 0.0
    %332 = vmatpush.msra.mxu0 0.0
    %333 = vmatpush.msra.mxu0 0.0
    %334 = vmatpush.msra.mxu0 0.0
    %335 = vmatpush.msra.mxu0 0.0
    %336 = vmatpush.msra.mxu0 0.0
    %337 = vmatpush.msra.mxu0 %v33
    %338 = vmatpush.msra.mxu0 %v32
    %339 = vmatpush.msra.mxu0 %v31
    %340 = vmatpush.msra.mxu0 %v30
    %341 = vmatmul.f32.gmra.mxu0 %v323
    %v342 = vpop.f32.mrf.mxu0
    %v343 = vadd.f32 0.0, %v342
    %344 = vdwg.mxu0
    %v345 = vadd.f32 %v319, %v343
    %v346 = vtanh.pop %v345
    %v347 = vxor.u32 %v345, 2147483648
    %v348 = vmul.f32 %v347, 1.442695
    %v349 = vpow.pop %v348
    %v350 = vadd.f32 %v349, 1.0
    %v351 = vrcp.pop %v350
    %v352 = vmul.f32 %v350, %v351
    %v353 = vsub.f32 1.0, %v352
    %v354 = vmul.f32 %v351, %v353
    %v355 = vadd.f32 %v351, %v354
    %vm356 = vweird.f32 %v350
    %vm357 = vweird.f32 %v351
    %vm358 = vmor %vm356, %vm357
    %v359 = vsel %vm358, %v351, %v355
    %v360 = vand.u32 2147483647, %v350
    %vm361 = vcmp.eq.f32.partialorder %v360, 8.507059e+37
    %v362 = vand.u32 %v350, 2147483648
    %v363 = vor.u32 1.1754944e-38, %v362
    %v364 = vsel %vm361, %v363, %v359
    %v365 = vmul.f32 1.0, %v364
    %v366 = vsel %vm42, %v346, %v365
    %v367 = vmul.f32 %v366, %v312
    %369 = vrot.lane.b32.xlu0 %v366, 64
    %v370 = vpop.permute.xlu0 %369
    %v372 = vmul.f32 %v366, %v370
    %374 = vrot.lane.b32.xlu0 %v372, 32
    %v375 = vpop.permute.xlu0 %374
    %v377 = vadd.f32 %v367, %v375
    %v378 = vtanh.pop %v377
    %380 = vrot.lane.b32.xlu0 %v378, 64
    %v381 = vpop.permute.xlu0 %380
    %v383 = vmul.f32 %v366, %v381
    %v384 = vld [vmem:[#allocation2 + $0x20] sm:$0xff]
    %386 = vrot.lane.b32.xlu0 %v383, 32
    %v387 = vpop.permute.xlu0 %386
    %v388 = vsel %vm126, %v387, 0
    %390 = vmatpush.msra.mxu0 0.0
    %391 = vmatpush.msra.mxu0 0.0
    %392 = vmatpush.msra.mxu0 0.0
    %393 = vmatpush.msra.mxu0 0.0
    %394 = vmatpush.msra.mxu0 0.0
    %395 = vmatpush.msra.mxu0 0.0
    %396 = vmatpush.msra.mxu0 0.0
    %397 = vmatpush.msra.mxu0 0.0
    %398 = vmatpush.msra.mxu0 0.0
    %399 = vmatpush.msra.mxu0 0.0
    %400 = vmatpush.msra.mxu0 0.0
    %401 = vmatpush.msra.mxu0 0.0
    %402 = vmatpush.msra.mxu0 %v33
    %403 = vmatpush.msra.mxu0 %v32
    %404 = vmatpush.msra.mxu0 %v31
    %405 = vmatpush.msra.mxu0 %v30
    %406 = vmatmul.f32.gmra.mxu0 %v388
    %v407 = vpop.f32.mrf.mxu0
    %v408 = vadd.f32 0.0, %v407
    %409 = vdwg.mxu0
    %v410 = vadd.f32 %v384, %v408
    %v411 = vtanh.pop %v410
    %v412 = vxor.u32 %v410, 2147483648
    %v413 = vmul.f32 %v412, 1.442695
    %v414 = vpow.pop %v413
    %v415 = vadd.f32 %v414, 1.0
    %v416 = vrcp.pop %v415
    %v417 = vmul.f32 %v415, %v416
    %v418 = vsub.f32 1.0, %v417
    %v419 = vmul.f32 %v416, %v418
    %v420 = vadd.f32 %v416, %v419
    %vm421 = vweird.f32 %v415
    %vm422 = vweird.f32 %v416
    %vm423 = vmor %vm421, %vm422
    %v424 = vsel %vm423, %v416, %v420
    %v425 = vand.u32 2147483647, %v415
    %vm426 = vcmp.eq.f32.partialorder %v425, 8.507059e+37
    %v427 = vand.u32 %v415, 2147483648
    %v428 = vor.u32 1.1754944e-38, %v427
    %v429 = vsel %vm426, %v428, %v424
    %v430 = vmul.f32 1.0, %v429
    %v431 = vsel %vm42, %v411, %v430
    %v432 = vmul.f32 %v431, %v377
    %434 = vrot.lane.b32.xlu0 %v431, 64
    %v435 = vpop.permute.xlu0 %434
    %v437 = vmul.f32 %v431, %v435
    %439 = vrot.lane.b32.xlu0 %v437, 32
    %v440 = vpop.permute.xlu0 %439
    %v442 = vadd.f32 %v432, %v440
    %v443 = vtanh.pop %v442
    %445 = vrot.lane.b32.xlu0 %v443, 64
    %v446 = vpop.permute.xlu0 %445
    %v448 = vmul.f32 %v431, %v446
    %v449 = vld [vmem:[#allocation2 + $0x28] sm:$0xff]
    %451 = vrot.lane.b32.xlu0 %v448, 32
    %v452 = vpop.permute.xlu0 %451
    %v453 = vsel %vm126, %v452, 0
    %455 = vmatpush.msra.mxu0 0.0
    %456 = vmatpush.msra.mxu0 0.0
    %457 = vmatpush.msra.mxu0 0.0
    %458 = vmatpush.msra.mxu0 0.0
    %459 = vmatpush.msra.mxu0 0.0
    %460 = vmatpush.msra.mxu0 0.0
    %461 = vmatpush.msra.mxu0 0.0
    %462 = vmatpush.msra.mxu0 0.0
    %463 = vmatpush.msra.mxu0 0.0
    %464 = vmatpush.msra.mxu0 0.0
    %465 = vmatpush.msra.mxu0 0.0
    %466 = vmatpush.msra.mxu0 0.0
    %467 = vmatpush.msra.mxu0 %v33
    %468 = vmatpush.msra.mxu0 %v32
    %469 = vmatpush.msra.mxu0 %v31
    %470 = vmatpush.msra.mxu0 %v30
    %471 = vmatmul.f32.gmra.mxu0 %v453
    %v472 = vpop.f32.mrf.mxu0
    %v473 = vadd.f32 0.0, %v472
    %474 = vdwg.mxu0
    %v475 = vadd.f32 %v449, %v473
    %v476 = vtanh.pop %v475
    %v477 = vxor.u32 %v475, 2147483648
    %v478 = vmul.f32 %v477, 1.442695
    %v479 = vpow.pop %v478
    %v480 = vadd.f32 %v479, 1.0
    %v481 = vrcp.pop %v480
    %v482 = vmul.f32 %v480, %v481
    %v483 = vsub.f32 1.0, %v482
    %v484 = vmul.f32 %v481, %v483
    %v485 = vadd.f32 %v481, %v484
    %vm486 = vweird.f32 %v480
    %vm487 = vweird.f32 %v481
    %vm488 = vmor %vm486, %vm487
    %v489 = vsel %vm488, %v481, %v485
    %v490 = vand.u32 2147483647, %v480
    %vm491 = vcmp.eq.f32.partialorder %v490, 8.507059e+37
    %v492 = vand.u32 %v480, 2147483648
    %v493 = vor.u32 1.1754944e-38, %v492
    %v494 = vsel %vm491, %v493, %v489
    %v495 = vmul.f32 1.0, %v494
    %v496 = vsel %vm42, %v476, %v495
    %v497 = vmul.f32 %v496, %v442
    %499 = vrot.lane.b32.xlu0 %v496, 64
    %v500 = vpop.permute.xlu0 %499
    %v502 = vmul.f32 %v496, %v500
    %504 = vrot.lane.b32.xlu0 %v502, 32
    %v505 = vpop.permute.xlu0 %504
    %v507 = vadd.f32 %v497, %v505
    %v508 = vtanh.pop %v507
    %510 = vrot.lane.b32.xlu0 %v508, 64
    %v511 = vpop.permute.xlu0 %510
    %v513 = vmul.f32 %v496, %v511
    %v514 = vld [vmem:[#allocation2 + $0x30] sm:$0xff]
    %516 = vrot.lane.b32.xlu0 %v513, 32
    %v517 = vpop.permute.xlu0 %516
    %v518 = vsel %vm126, %v517, 0
    %520 = vmatpush.msra.mxu0 0.0
    %521 = vmatpush.msra.mxu0 0.0
    %522 = vmatpush.msra.mxu0 0.0
    %523 = vmatpush.msra.mxu0 0.0
    %524 = vmatpush.msra.mxu0 0.0
    %525 = vmatpush.msra.mxu0 0.0
    %526 = vmatpush.msra.mxu0 0.0
    %527 = vmatpush.msra.mxu0 0.0
    %528 = vmatpush.msra.mxu0 0.0
    %529 = vmatpush.msra.mxu0 0.0
    %530 = vmatpush.msra.mxu0 0.0
    %531 = vmatpush.msra.mxu0 0.0
    %532 = vmatpush.msra.mxu0 %v33
    %533 = vmatpush.msra.mxu0 %v32
    %534 = vmatpush.msra.mxu0 %v31
    %535 = vmatpush.msra.mxu0 %v30
    %536 = vmatmul.f32.gmra.mxu0 %v518
    %v537 = vpop.f32.mrf.mxu0
    %v538 = vadd.f32 0.0, %v537
    %539 = vdwg.mxu0
    %v540 = vadd.f32 %v514, %v538
    %v541 = vtanh.pop %v540
    %v542 = vxor.u32 %v540, 2147483648
    %v543 = vmul.f32 %v542, 1.442695
    %v544 = vpow.pop %v543
    %v545 = vadd.f32 %v544, 1.0
    %v546 = vrcp.pop %v545
    %v547 = vmul.f32 %v545, %v546
    %v548 = vsub.f32 1.0, %v547
    %v549 = vmul.f32 %v546, %v548
    %v550 = vadd.f32 %v546, %v549
    %vm551 = vweird.f32 %v545
    %vm552 = vweird.f32 %v546
    %vm553 = vmor %vm551, %vm552
    %v554 = vsel %vm553, %v546, %v550
    %v555 = vand.u32 2147483647, %v545
    %vm556 = vcmp.eq.f32.partialorder %v555, 8.507059e+37
    %v557 = vand.u32 %v545, 2147483648
    %v558 = vor.u32 1.1754944e-38, %v557
    %v559 = vsel %vm556, %v558, %v554
    %v560 = vmul.f32 1.0, %v559
    %v561 = vsel %vm42, %v541, %v560
    %v562 = vmul.f32 %v561, %v507
    %564 = vrot.lane.b32.xlu0 %v561, 64
    %v565 = vpop.permute.xlu0 %564
    %v567 = vmul.f32 %v561, %v565
    %569 = vrot.lane.b32.xlu0 %v567, 32
    %v570 = vpop.permute.xlu0 %569
    %v572 = vadd.f32 %v562, %v570
    %v573 = vtanh.pop %v572
    %575 = vrot.lane.b32.xlu0 %v573, 64
    %v576 = vpop.permute.xlu0 %575
    %v578 = vmul.f32 %v561, %v576
    %v579 = vld [vmem:[#allocation2 + $0x38] sm:$0xff]
    %581 = vrot.lane.b32.xlu0 %v578, 32
    %v582 = vpop.permute.xlu0 %581
    %v583 = vsel %vm126, %v582, 0
    %585 = vmatpush.msra.mxu0 0.0
    %586 = vmatpush.msra.mxu0 0.0
    %587 = vmatpush.msra.mxu0 0.0
    %588 = vmatpush.msra.mxu0 0.0
    %589 = vmatpush.msra.mxu0 0.0
    %590 = vmatpush.msra.mxu0 0.0
    %591 = vmatpush.msra.mxu0 0.0
    %592 = vmatpush.msra.mxu0 0.0
    %593 = vmatpush.msra.mxu0 0.0
    %594 = vmatpush.msra.mxu0 0.0
    %595 = vmatpush.msra.mxu0 0.0
    %596 = vmatpush.msra.mxu0 0.0
    %597 = vmatpush.msra.mxu0 %v33
    %598 = vmatpush.msra.mxu0 %v32
    %599 = vmatpush.msra.mxu0 %v31
    %600 = vmatpush.msra.mxu0 %v30
    %601 = vmatmul.f32.gmra.mxu0 %v583
    %v602 = vpop.f32.mrf.mxu0
    %v603 = vadd.f32 0.0, %v602
    %604 = vdwg.mxu0
    %v605 = vadd.f32 %v579, %v603
    %v606 = vtanh.pop %v605
    %v607 = vxor.u32 %v605, 2147483648
    %v608 = vmul.f32 %v607, 1.442695
    %v609 = vpow.pop %v608
    %v610 = vadd.f32 %v609, 1.0
    %v611 = vrcp.pop %v610
    %v612 = vmul.f32 %v610, %v611
    %v613 = vsub.f32 1.0, %v612
    %v614 = vmul.f32 %v611, %v613
    %v615 = vadd.f32 %v611, %v614
    %vm616 = vweird.f32 %v610
    %vm617 = vweird.f32 %v611
    %vm618 = vmor %vm616, %vm617
    %v619 = vsel %vm618, %v611, %v615
    %v620 = vand.u32 2147483647, %v610
    %vm621 = vcmp.eq.f32.partialorder %v620, 8.507059e+37
    %v622 = vand.u32 %v610, 2147483648
    %v623 = vor.u32 1.1754944e-38, %v622
    %v624 = vsel %vm621, %v623, %v619
    %v625 = vmul.f32 1.0, %v624
    %v626 = vsel %vm42, %v606, %v625
    %v627 = vmul.f32 %v626, %v572
    %629 = vrot.lane.b32.xlu0 %v626, 64
    %v630 = vpop.permute.xlu0 %629
    %v632 = vmul.f32 %v626, %v630
    %634 = vrot.lane.b32.xlu0 %v632, 32
    %v635 = vpop.permute.xlu0 %634
    %v637 = vadd.f32 %v627, %v635
    %v638 = vtanh.pop %v637
    %640 = vrot.lane.b32.xlu0 %v638, 64
    %v641 = vpop.permute.xlu0 %640
    %v643 = vmul.f32 %v626, %v641
    %645 = vrot.lane.b32.xlu0 %v643, 32
    %v646 = vpop.permute.xlu0 %645
    %v647 = vsel %vm126, %v646, 0
    %649 = vmatpush.msra.mxu0 0.0
    %650 = vmatpush.msra.mxu0 0.0
    %651 = vmatpush.msra.mxu0 0.0
    %652 = vmatpush.msra.mxu0 0.0
    %653 = vmatpush.msra.mxu0 0.0
    %654 = vmatpush.msra.mxu0 0.0
    %655 = vmatpush.msra.mxu0 0.0
    %656 = vmatpush.msra.mxu0 0.0
    %657 = vmatpush.msra.mxu0 0.0
    %658 = vmatpush.msra.mxu0 0.0
    %659 = vmatpush.msra.mxu0 0.0
    %660 = vmatpush.msra.mxu0 0.0
    %661 = vmatpush.msra.mxu0 %v37
    %662 = vmatpush.msra.mxu0 %v36
    %663 = vmatpush.msra.mxu0 %v35
    %664 = vmatpush.msra.mxu0 %v34
    %665 = vmatmul.f32.gmra.mxu0 %v647
    %v666 = vpop.f32.mrf.mxu0
    %v667 = vadd.f32 %v27, %v666
    %668 = vdwg.mxu0
    %v669 = vmax.f32 %v667, 0.0
    %670 = vst [vmem:[#allocation3] sm:$0xff] %v669
    %671 = vmatpush.msra.mxu0 0.0
    %672 = vmatpush.msra.mxu0 0.0
    %673 = vmatpush.msra.mxu0 0.0
    %674 = vmatpush.msra.mxu0 0.0
    %675 = vmatpush.msra.mxu0 0.0
    %676 = vmatpush.msra.mxu0 0.0
    %677 = vmatpush.msra.mxu0 0.0
    %678 = vmatpush.msra.mxu0 0.0
    %679 = vmatpush.msra.mxu0 0.0
    %680 = vmatpush.msra.mxu0 0.0
    %681 = vmatpush.msra.mxu0 0.0
    %682 = vmatpush.msra.mxu0 0.0
    %683 = vmatpush.msra.mxu0 %v33
    %684 = vmatpush.msra.mxu0 %v32
    %685 = vmatpush.msra.mxu0 %v31
    %686 = vmatpush.msra.mxu0 %v30
    %687 = vmatmul.f32.gmra.mxu0 %v647
    %v688 = vpop.f32.mrf.mxu0
    %v689 = vadd.f32 0.0, %v688
    %690 = vdwg.mxu0
    %v692 = vsel %vm51, %v669, 0
    %694 = vmatpush.msra.mxu0 0.0
    %695 = vmatpush.msra.mxu0 0.0
    %696 = vmatpush.msra.mxu0 0.0
    %697 = vmatpush.msra.mxu0 0.0
    %698 = vmatpush.msra.mxu0 0.0
    %699 = vmatpush.msra.mxu0 0.0
    %700 = vmatpush.msra.mxu0 0.0
    %701 = vmatpush.msra.mxu0 0.0
    %702 = vmatpush.msra.mxu0 0.0
    %703 = vmatpush.msra.mxu0 0.0
    %704 = vmatpush.msra.mxu0 0.0
    %705 = vmatpush.msra.mxu0 0.0
    %706 = vmatpush.msra.mxu0 0.0
    %707 = vmatpush.msra.mxu0 0.0
    %708 = vmatpush.msra.mxu0 0.0
    %709 = vmatpush.msra.mxu0 %v29
    %710 = vmatmul.f32.gmra.mxu0 %v692
    %v711 = vpop.f32.mrf.mxu0
    %v712 = vadd.f32 %v689, %v711
    %713 = vdwg.mxu0
    %v714 = vadd.f32 %v712, %v23
    %v715 = vtanh.pop %v714
    %v716 = vxor.u32 %v714, 2147483648
    %v717 = vmul.f32 %v716, 1.442695
    %v718 = vpow.pop %v717
    %v719 = vadd.f32 %v718, 1.0
    %v720 = vrcp.pop %v719
    %v721 = vmul.f32 %v719, %v720
    %v722 = vsub.f32 1.0, %v721
    %v723 = vmul.f32 %v720, %v722
    %v724 = vadd.f32 %v720, %v723
    %vm725 = vweird.f32 %v719
    %vm726 = vweird.f32 %v720
    %vm727 = vmor %vm725, %vm726
    %v728 = vsel %vm727, %v720, %v724
    %v729 = vand.u32 2147483647, %v719
    %vm730 = vcmp.eq.f32.partialorder %v729, 8.507059e+37
    %v731 = vand.u32 %v719, 2147483648
    %v732 = vor.u32 1.1754944e-38, %v731
    %v733 = vsel %vm730, %v732, %v728
    %v734 = vmul.f32 1.0, %v733
    %v735 = vsel %vm42, %v715, %v734
    %v736 = vmul.f32 %v735, %v637
    %738 = vrot.lane.b32.xlu0 %v735, 64
    %v739 = vpop.permute.xlu0 %738
    %v741 = vmul.f32 %v735, %v739
    %743 = vrot.lane.b32.xlu0 %v741, 32
    %v744 = vpop.permute.xlu0 %743
    %v746 = vadd.f32 %v736, %v744
    %v747 = vtanh.pop %v746
    %749 = vrot.lane.b32.xlu0 %v747, 64
    %v750 = vpop.permute.xlu0 %749
    %v752 = vmul.f32 %v735, %v750
    %754 = vrot.lane.b32.xlu0 %v752, 32
    %v755 = vpop.permute.xlu0 %754
    %v756 = vsel %vm126, %v755, 0
    %758 = vmatpush.msra.mxu0 0.0
    %759 = vmatpush.msra.mxu0 0.0
    %760 = vmatpush.msra.mxu0 0.0
    %761 = vmatpush.msra.mxu0 0.0
    %762 = vmatpush.msra.mxu0 0.0
    %763 = vmatpush.msra.mxu0 0.0
    %764 = vmatpush.msra.mxu0 0.0
    %765 = vmatpush.msra.mxu0 0.0
    %766 = vmatpush.msra.mxu0 0.0
    %767 = vmatpush.msra.mxu0 0.0
    %768 = vmatpush.msra.mxu0 0.0
    %769 = vmatpush.msra.mxu0 0.0
    %770 = vmatpush.msra.mxu0 %v37
    %771 = vmatpush.msra.mxu0 %v36
    %772 = vmatpush.msra.mxu0 %v35
    %773 = vmatpush.msra.mxu0 %v34
    %774 = vmatmul.f32.gmra.mxu0 %v756
    %v775 = vpop.f32.mrf.mxu0
    %v776 = vadd.f32 %v27, %v775
    %777 = vdwg.mxu0
    %v778 = vmax.f32 %v776, 0.0
    %s779 = scalar_lea.vmem [#allocation3], 8
    %780 = vst [vmem:[%s779] sm:$0xff] %v778
    %781 = vmatpush.msra.mxu0 0.0
    %782 = vmatpush.msra.mxu0 0.0
    %783 = vmatpush.msra.mxu0 0.0
    %784 = vmatpush.msra.mxu0 0.0
    %785 = vmatpush.msra.mxu0 0.0
    %786 = vmatpush.msra.mxu0 0.0
    %787 = vmatpush.msra.mxu0 0.0
    %788 = vmatpush.msra.mxu0 0.0
    %789 = vmatpush.msra.mxu0 0.0
    %790 = vmatpush.msra.mxu0 0.0
    %791 = vmatpush.msra.mxu0 0.0
    %792 = vmatpush.msra.mxu0 0.0
    %793 = vmatpush.msra.mxu0 %v33
    %794 = vmatpush.msra.mxu0 %v32
    %795 = vmatpush.msra.mxu0 %v31
    %796 = vmatpush.msra.mxu0 %v30
    %797 = vmatmul.f32.gmra.mxu0 %v756
    %v798 = vpop.f32.mrf.mxu0
    %v799 = vadd.f32 0.0, %v798
    %800 = vdwg.mxu0
    %v802 = vsel %vm51, %v778, 0
    %804 = vmatpush.msra.mxu0 0.0
    %805 = vmatpush.msra.mxu0 0.0
    %806 = vmatpush.msra.mxu0 0.0
    %807 = vmatpush.msra.mxu0 0.0
    %808 = vmatpush.msra.mxu0 0.0
    %809 = vmatpush.msra.mxu0 0.0
    %810 = vmatpush.msra.mxu0 0.0
    %811 = vmatpush.msra.mxu0 0.0
    %812 = vmatpush.msra.mxu0 0.0
    %813 = vmatpush.msra.mxu0 0.0
    %814 = vmatpush.msra.mxu0 0.0
    %815 = vmatpush.msra.mxu0 0.0
    %816 = vmatpush.msra.mxu0 0.0
    %817 = vmatpush.msra.mxu0 0.0
    %818 = vmatpush.msra.mxu0 0.0
    %819 = vmatpush.msra.mxu0 %v29
    %820 = vmatmul.f32.gmra.mxu0 %v802
    %v821 = vpop.f32.mrf.mxu0
    %v822 = vadd.f32 %v799, %v821
    %823 = vdwg.mxu0
    %v824 = vadd.f32 %v822, %v23
    %v825 = vtanh.pop %v824
    %v826 = vxor.u32 %v824, 2147483648
    %v827 = vmul.f32 %v826, 1.442695
    %v828 = vpow.pop %v827
    %v829 = vadd.f32 %v828, 1.0
    %v830 = vrcp.pop %v829
    %v831 = vmul.f32 %v829, %v830
    %v832 = vsub.f32 1.0, %v831
    %v833 = vmul.f32 %v830, %v832
    %v834 = vadd.f32 %v830, %v833
    %vm835 = vweird.f32 %v829
    %vm836 = vweird.f32 %v830
    %vm837 = vmor %vm835, %vm836
    %v838 = vsel %vm837, %v830, %v834
    %v839 = vand.u32 2147483647, %v829
    %vm840 = vcmp.eq.f32.partialorder %v839, 8.507059e+37
    %v841 = vand.u32 %v829, 2147483648
    %v842 = vor.u32 1.1754944e-38, %v841
    %v843 = vsel %vm840, %v842, %v838
    %v844 = vmul.f32 1.0, %v843
    %v845 = vsel %vm42, %v825, %v844
    %v846 = vmul.f32 %v845, %v746
    %848 = vrot.lane.b32.xlu0 %v845, 64
    %v849 = vpop.permute.xlu0 %848
    %v851 = vmul.f32 %v845, %v849
    %853 = vrot.lane.b32.xlu0 %v851, 32
    %v854 = vpop.permute.xlu0 %853
    %v856 = vadd.f32 %v846, %v854
    %v857 = vtanh.pop %v856
    %859 = vrot.lane.b32.xlu0 %v857, 64
    %v860 = vpop.permute.xlu0 %859
    %v862 = vmul.f32 %v845, %v860
    %864 = vrot.lane.b32.xlu0 %v862, 32
    %v865 = vpop.permute.xlu0 %864
    %v866 = vsel %vm126, %v865, 0
    %868 = vmatpush.msra.mxu0 0.0
    %869 = vmatpush.msra.mxu0 0.0
    %870 = vmatpush.msra.mxu0 0.0
    %871 = vmatpush.msra.mxu0 0.0
    %872 = vmatpush.msra.mxu0 0.0
    %873 = vmatpush.msra.mxu0 0.0
    %874 = vmatpush.msra.mxu0 0.0
    %875 = vmatpush.msra.mxu0 0.0
    %876 = vmatpush.msra.mxu0 0.0
    %877 = vmatpush.msra.mxu0 0.0
    %878 = vmatpush.msra.mxu0 0.0
    %879 = vmatpush.msra.mxu0 0.0
    %880 = vmatpush.msra.mxu0 %v37
    %881 = vmatpush.msra.mxu0 %v36
    %882 = vmatpush.msra.mxu0 %v35
    %883 = vmatpush.msra.mxu0 %v34
    %884 = vmatmul.f32.gmra.mxu0 %v866
    %v885 = vpop.f32.mrf.mxu0
    %v886 = vadd.f32 %v27, %v885
    %887 = vdwg.mxu0
    %v888 = vmax.f32 %v886, 0.0
    %s889 = scalar_lea.vmem [#allocation3], 16
    %890 = vst [vmem:[%s889] sm:$0xff] %v888
    %891 = vmatpush.msra.mxu0 0.0
    %892 = vmatpush.msra.mxu0 0.0
    %893 = vmatpush.msra.mxu0 0.0
    %894 = vmatpush.msra.mxu0 0.0
    %895 = vmatpush.msra.mxu0 0.0
    %896 = vmatpush.msra.mxu0 0.0
    %897 = vmatpush.msra.mxu0 0.0
    %898 = vmatpush.msra.mxu0 0.0
    %899 = vmatpush.msra.mxu0 0.0
    %900 = vmatpush.msra.mxu0 0.0
    %901 = vmatpush.msra.mxu0 0.0
    %902 = vmatpush.msra.mxu0 0.0
    %903 = vmatpush.msra.mxu0 %v33
    %904 = vmatpush.msra.mxu0 %v32
    %905 = vmatpush.msra.mxu0 %v31
    %906 = vmatpush.msra.mxu0 %v30
    %907 = vmatmul.f32.gmra.mxu0 %v866
    %v908 = vpop.f32.mrf.mxu0
    %v909 = vadd.f32 0.0, %v908
    %910 = vdwg.mxu0
    %v912 = vsel %vm51, %v888, 0
    %914 = vmatpush.msra.mxu0 0.0
    %915 = vmatpush.msra.mxu0 0.0
    %916 = vmatpush.msra.mxu0 0.0
    %917 = vmatpush.msra.mxu0 0.0
    %918 = vmatpush.msra.mxu0 0.0
    %919 = vmatpush.msra.mxu0 0.0
    %920 = vmatpush.msra.mxu0 0.0
    %921 = vmatpush.msra.mxu0 0.0
    %922 = vmatpush.msra.mxu0 0.0
    %923 = vmatpush.msra.mxu0 0.0
    %924 = vmatpush.msra.mxu0 0.0
    %925 = vmatpush.msra.mxu0 0.0
    %926 = vmatpush.msra.mxu0 0.0
    %927 = vmatpush.msra.mxu0 0.0
    %928 = vmatpush.msra.mxu0 0.0
    %929 = vmatpush.msra.mxu0 %v29
    %930 = vmatmul.f32.gmra.mxu0 %v912
    %v931 = vpop.f32.mrf.mxu0
    %v932 = vadd.f32 %v909, %v931
    %933 = vdwg.mxu0
    %v934 = vadd.f32 %v932, %v23
    %v935 = vtanh.pop %v934
    %v936 = vxor.u32 %v934, 2147483648
    %v937 = vmul.f32 %v936, 1.442695
    %v938 = vpow.pop %v937
    %v939 = vadd.f32 %v938, 1.0
    %v940 = vrcp.pop %v939
    %v941 = vmul.f32 %v939, %v940
    %v942 = vsub.f32 1.0, %v941
    %v943 = vmul.f32 %v940, %v942
    %v944 = vadd.f32 %v940, %v943
    %vm945 = vweird.f32 %v939
    %vm946 = vweird.f32 %v940
    %vm947 = vmor %vm945, %vm946
    %v948 = vsel %vm947, %v940, %v944
    %v949 = vand.u32 2147483647, %v939
    %vm950 = vcmp.eq.f32.partialorder %v949, 8.507059e+37
    %v951 = vand.u32 %v939, 2147483648
    %v952 = vor.u32 1.1754944e-38, %v951
    %v953 = vsel %vm950, %v952, %v948
    %v954 = vmul.f32 1.0, %v953
    %v955 = vsel %vm42, %v935, %v954
    %v956 = vmul.f32 %v955, %v856
    %958 = vrot.lane.b32.xlu0 %v955, 64
    %v959 = vpop.permute.xlu0 %958
    %v961 = vmul.f32 %v955, %v959
    %963 = vrot.lane.b32.xlu0 %v961, 32
    %v964 = vpop.permute.xlu0 %963
    %v966 = vadd.f32 %v956, %v964
    %v967 = vtanh.pop %v966
    %969 = vrot.lane.b32.xlu0 %v967, 64
    %v970 = vpop.permute.xlu0 %969
    %v972 = vmul.f32 %v955, %v970
    %974 = vrot.lane.b32.xlu0 %v972, 32
    %v975 = vpop.permute.xlu0 %974
    %v976 = vsel %vm126, %v975, 0
    %978 = vmatpush.msra.mxu0 0.0
    %979 = vmatpush.msra.mxu0 0.0
    %980 = vmatpush.msra.mxu0 0.0
    %981 = vmatpush.msra.mxu0 0.0
    %982 = vmatpush.msra.mxu0 0.0
    %983 = vmatpush.msra.mxu0 0.0
    %984 = vmatpush.msra.mxu0 0.0
    %985 = vmatpush.msra.mxu0 0.0
    %986 = vmatpush.msra.mxu0 0.0
    %987 = vmatpush.msra.mxu0 0.0
    %988 = vmatpush.msra.mxu0 0.0
    %989 = vmatpush.msra.mxu0 0.0
    %990 = vmatpush.msra.mxu0 %v37
    %991 = vmatpush.msra.mxu0 %v36
    %992 = vmatpush.msra.mxu0 %v35
    %993 = vmatpush.msra.mxu0 %v34
    %994 = vmatmul.f32.gmra.mxu0 %v976
    %v995 = vpop.f32.mrf.mxu0
    %v996 = vadd.f32 %v27, %v995
    %997 = vdwg.mxu0
    %v998 = vmax.f32 %v996, 0.0
    %s999 = scalar_lea.vmem [#allocation3], 24
    %1000 = vst [vmem:[%s999] sm:$0xff] %v998
    // Predicated region
    $region22: #{tpu_custom_call.1} parent=1 // pred_check
      _
    $region23: #{tpu_custom_call.1} parent=1 // pred_check_branch
      %1002 = sbr.rel (0) target = $region25
    $region24: #{tpu_custom_call.1} parent=1 // pred_region
      %1004 = vsyncadd [#allocation4], 0
      %s1005 = sshll.u32 [#allocation3], 4
      %s1006 = int_to_ptr.vmem [resolvable:$true] %s1005
      %s1007 = sshll.u32 %s5, 4
      %s1008 = int_to_ptr.hbm [resolvable:$true] %s1007
      %1013 = dma.vmem_to_hbm [thread:$0]  %s1006, 512, %s1008, [#allocation4], 128, 128, 8
    $region25: #{tpu_custom_call.1} parent=1 // pred_fallthru
      _
    // Predicated region
    $region26: #{tpu_custom_call.1} parent=1 // pred_check
      _
    $region27: #{tpu_custom_call.1} parent=1 // pred_check_branch
      %1015 = sbr.rel (0) target = $region29
    $region28: #{tpu_custom_call.1} parent=1 // pred_region
      %1017 = dma.done [#allocation4], 512
    $region29: #{tpu_custom_call.1} parent=1 // pred_fallthru
      _
    %1018 = vsyncpa [#allocation4], 1

</llo_original>
